<compile_context>
chip_gen: v7x
topology: tpu7x:2x2x1
jax: 0.10.0
libtpu: 0.0.40
codegen_flags: <defaults>
</compile_context>

<pallas_src>
import functools

import jax
import jax.numpy as jnp
from jax import lax
from jax.experimental import pallas as pl
from jax.experimental.pallas import tpu as pltpu

INPUT_SIZE = 12
H1, H2, H3 = 64, 32, 1
LANE = 128
MAX_TILE = 8192   # max batch columns per grid step


def _mlp_kernel(x_ref, w1_ref, b1_ref, w2_ref, b2_ref, w3_ref, b3_ref, o_ref):
    # x_ref: f32 [tb, 12] (natural [batch, feature] layout straight from HBM).
    xb = x_ref[...].astype(jnp.bfloat16)                         # in-kernel cast (VPU)

    # fc1: einsum('hk,bk->hb') — bf16 x bf16, f32 accumulate on the MXU.
    # Contracting the last dims of both operands lands the result lane-dense
    # as [64, tb] without any wrapper-side transpose of x.
    h = lax.dot_general(w1_ref[...], xb, (((1,), (1,)), ((), ())),
                        preferred_element_type=jnp.float32)      # [64, tb] f32
    h = jnp.maximum(h + b1_ref[...], 0.0)                        # bias + ReLU (f32 VPU)

    # fc2: bf16 feeds, f32 accumulate.
    h = jnp.dot(w2_ref[...], h.astype(jnp.bfloat16),
                preferred_element_type=jnp.float32)              # [32, tb]
    h = jnp.maximum(h + b2_ref[...], 0.0)

    # fc3 + sigmoid (EUP), lane-dense [1, tb] output block -> unmasked vst.
    h = jnp.dot(w3_ref[...], h.astype(jnp.bfloat16),
                preferred_element_type=jnp.float32)              # [1, tb]
    o_ref[...] = jax.nn.sigmoid(h + b3_ref[...]).astype(o_ref.dtype)


def _pick_batch_tile(B):
    """Batch tile (multiple of 128): big enough to amortize per-step overhead,
    capped at MAX_TILE for VMEM, with an even grid length (>=2) when possible
    so v7x megacore splits the batch axis evenly."""
    u = pl.cdiv(B, LANE)                     # batch in 128-lane column groups
    if u <= 2:
        return LANE
    t = min(MAX_TILE // LANE, u // 2)        # guarantees >= 2 grid steps
    # Nudge the tile down (at most ~halving) to make the grid length even.
    t_min = max(1, t // 2)
    tt = t
    while tt > t_min and (pl.cdiv(u, tt) % 2) != 0:
        tt -= 1
    if pl.cdiv(u, tt) % 2 == 0:
        t = tt
    return t * LANE


@functools.partial(jax.jit, static_argnames=("batch_tile",))
def forecasting_nn_forward(x, params, *, batch_tile=None):
    """x: [B, INPUT_SIZE] float32 -> [B, 1] float32."""
    w1, b1, w2, b2, w3, b3 = params
    B, F = x.shape
    assert F == INPUT_SIZE

    tb = _pick_batch_tile(B) if batch_tile is None else batch_tile
    assert tb % LANE == 0, "batch tile must be a multiple of 128 (lane width)"

    # Only the tiny weights/biases get re-laid-out in the wrapper; x goes to
    # the kernel untouched (no extra HBM pass).
    w1t = w1.T.astype(jnp.bfloat16)                 # [64, 12]
    w2t = w2.T.astype(jnp.bfloat16)                 # [32, 64]
    w3t = w3.T.astype(jnp.bfloat16)                 # [ 1, 32]
    b1c = b1.reshape(H1, 1).astype(jnp.float32)     # column biases (broadcast over lanes)
    b2c = b2.reshape(H2, 1).astype(jnp.float32)
    b3c = b3.reshape(H3, 1).astype(jnp.float32)

    grid = (pl.cdiv(B, tb),)
    # Constant index_map => Pallas skips re-DMA of these operands between steps.
    rep = lambda shape: pl.BlockSpec(shape, lambda i: (0, 0))

    out_t = pl.pallas_call(
        _mlp_kernel,
        out_shape=jax.ShapeDtypeStruct((H3, B), jnp.float32),
        grid=grid,
        in_specs=[
            pl.BlockSpec((tb, INPUT_SIZE), lambda i: (i, 0)),   # x batch tile [tb, 12]
            rep((H1, INPUT_SIZE)), rep((H1, 1)),                # fc1
            rep((H2, H1)),         rep((H2, 1)),                # fc2
            rep((H3, H2)),         rep((H3, 1)),                # fc3
        ],
        out_specs=pl.BlockSpec((H3, tb), lambda i: (0, i)),     # lane-dense [1, tb]
        compiler_params=pltpu.CompilerParams(
            dimension_semantics=("parallel",),                  # batch axis -> megacore on v7x
            vmem_limit_bytes=48 * 1024 * 1024,                  # headroom for large tiles on v5e
        ),
    )(x.astype(jnp.float32), w1t, b1c, w2t, b2c, w3t, b3c)

    return out_t.T                                              # [B, 1] f32


def init_params(key):
    """Deterministic init mimicking torch.nn.Linear default (U[-1/sqrt(fan_in), +])."""
    ks = jax.random.split(key, 6)

    def linear(kw, kb, fan_in, fan_out):
        bound = 1.0 / jnp.sqrt(jnp.float32(fan_in))
        w = jax.random.uniform(kw, (fan_in, fan_out), jnp.float32, -bound, bound)
        b = jax.random.uniform(kb, (fan_out,), jnp.float32, -bound, bound)
        return w, b

    w1, b1 = linear(ks[0], ks[1], INPUT_SIZE, H1)
    w2, b2 = linear(ks[2], ks[3], H1, H2)
    w3, b3 = linear(ks[4], ks[5], H2, H3)
    return (w1, b1, w2, b2, w3, b3)


def _reference_like_kernel(x, params):
    """Reference with the same bf16 roundings the kernel applies (f32 accumulate)."""
    w1, b1, w2, b2, w3, b3 = params
    r = lambda a: a.astype(jnp.bfloat16).astype(jnp.float32)
    h = jax.nn.relu(r(x) @ r(w1) + b1)
    h = jax.nn.relu(r(h) @ r(w2) + b2)
    return jax.nn.sigmoid(r(h) @ r(w3) + b3)


def _reference_f32(x, params):
    w1, b1, w2, b2, w3, b3 = params
    h = jax.nn.relu(x @ w1 + b1)
    h = jax.nn.relu(h @ w2 + b2)
    return jax.nn.sigmoid(h @ w3 + b3)


if __name__ == "__main__":
    key = jax.random.PRNGKey(0)
    k_params, k_x = jax.random.split(key)

    params = init_params(k_params)

    # Main check: B=256 -> tb=128, grid=2 (even; exercises the pipeline).
    B = 256
    x = jax.random.normal(k_x, (B, INPUT_SIZE), jnp.float32)
    out = jax.block_until_ready(forecasting_nn_forward(x, params))
    assert out.shape == (B, 1)

    ref_b = _reference_like_kernel(x, params)
    assert jnp.allclose(out, ref_b, atol=2e-3, rtol=2e-3)
    ref32 = _reference_f32(x, params)
    assert jnp.allclose(out, ref32, atol=5e-2)

    # Ragged-batch check: B not a multiple of the tile -> partial edge block
    # (relies on batch columns being independent; tail lanes are masked out).
    B2 = 200
    x2 = x[:B2]
    out2 = jax.block_until_ready(forecasting_nn_forward(x2, params))
    assert out2.shape == (B2, 1)
    assert jnp.allclose(out2, _reference_like_kernel(x2, params), atol=2e-3, rtol=2e-3)

    print("KERNEL_OK")
</pallas_src>

<mosaic_0001>
module attributes {stable_mosaic.version = 11 : i64} {
  func.func @_mlp_kernel(%arg0: i32, %arg1: memref<128x12xf32, #tpu.memory_space<vmem>>, %arg2: memref<64x12xbf16, #tpu.memory_space<vmem>>, %arg3: memref<64x1xf32, #tpu.memory_space<vmem>>, %arg4: memref<32x64xbf16, #tpu.memory_space<vmem>>, %arg5: memref<32x1xf32, #tpu.memory_space<vmem>>, %arg6: memref<1x32xbf16, #tpu.memory_space<vmem>>, %arg7: memref<1x1xf32, #tpu.memory_space<vmem>>, %arg8: memref<1x128xf32, #tpu.memory_space<vmem>>) attributes {dimension_semantics = [#tpu.dimension_semantics<parallel>], iteration_bounds = array<i64: 2>, scalar_prefetch = 0 : i64, scratch_operands = 0 : i64, tpu.core_type = #tpu.core_type<tc>, window_params = [{transform_indices = @transform_0, window_bounds = array<i64: 128, 12>}, {pipeline_mode = #tpu.pipeline_mode<synchronous>, transform_indices = @transform_1, window_bounds = array<i64: 64, 12>}, {pipeline_mode = #tpu.pipeline_mode<synchronous>, transform_indices = @transform_2, window_bounds = array<i64: 64, 1>}, {pipeline_mode = #tpu.pipeline_mode<synchronous>, transform_indices = @transform_3, window_bounds = array<i64: 32, 64>}, {pipeline_mode = #tpu.pipeline_mode<synchronous>, transform_indices = @transform_4, window_bounds = array<i64: 32, 1>}, {pipeline_mode = #tpu.pipeline_mode<synchronous>, transform_indices = @transform_5, window_bounds = array<i64: 1, 32>}, {pipeline_mode = #tpu.pipeline_mode<synchronous>, transform_indices = @transform_6, window_bounds = array<i64: 1, 1>}, {transform_indices = @transform_7, window_bounds = array<i64: 1, 128>}]} {
    %c0 = arith.constant 0 : index
    %c0_0 = arith.constant 0 : index
    %0 = vector.load %arg1[%c0, %c0_0] : memref<128x12xf32, #tpu.memory_space<vmem>>, vector<128x12xf32>
    %1 = arith.truncf %0 : vector<128x12xf32> to vector<128x12xbf16>
    %c0_1 = arith.constant 0 : index
    %c0_2 = arith.constant 0 : index
    %2 = vector.load %arg2[%c0_1, %c0_2] : memref<64x12xbf16, #tpu.memory_space<vmem>>, vector<64x12xbf16>
    %cst = arith.constant dense<0.000000e+00> : vector<64x128xf32>
    %3 = tpu.matmul %2, %1, %cst {dimension_numbers = #tpu.dot_dimension_numbers<[1], [1], [0], [0], [0, 0, 1, 0], [], []>} : vector<64x12xbf16>, vector<128x12xbf16>, vector<64x128xf32> -> vector<64x128xf32>
    %c0_3 = arith.constant 0 : index
    %c0_4 = arith.constant 0 : index
    %4 = vector.load %arg3[%c0_3, %c0_4] : memref<64x1xf32, #tpu.memory_space<vmem>>, vector<64x1xf32>
    %5 = vector.broadcast %4 : vector<64x1xf32> to vector<64x128xf32>
    %6 = arith.addf %3, %5 : vector<64x128xf32>
    %cst_5 = arith.constant 0.000000e+00 : f32
    %7 = vector.broadcast %cst_5 : f32 to vector<64x128xf32>
    %8 = arith.maximumf %6, %7 : vector<64x128xf32>
    %c0_6 = arith.constant 0 : index
    %c0_7 = arith.constant 0 : index
    %9 = vector.load %arg4[%c0_6, %c0_7] : memref<32x64xbf16, #tpu.memory_space<vmem>>, vector<32x64xbf16>
    %10 = arith.truncf %8 : vector<64x128xf32> to vector<64x128xbf16>
    %cst_8 = arith.constant dense<0.000000e+00> : vector<32x128xf32>
    %11 = tpu.matmul %9, %10, %cst_8 {dimension_numbers = #tpu.dot_dimension_numbers<[1], [0], [0], [1], [0, 0, 1, 1], [], []>} : vector<32x64xbf16>, vector<64x128xbf16>, vector<32x128xf32> -> vector<32x128xf32>
    %c0_9 = arith.constant 0 : index
    %c0_10 = arith.constant 0 : index
    %12 = vector.load %arg5[%c0_9, %c0_10] : memref<32x1xf32, #tpu.memory_space<vmem>>, vector<32x1xf32>
    %13 = vector.broadcast %12 : vector<32x1xf32> to vector<32x128xf32>
    %14 = arith.addf %11, %13 : vector<32x128xf32>
    %cst_11 = arith.constant 0.000000e+00 : f32
    %15 = vector.broadcast %cst_11 : f32 to vector<32x128xf32>
    %16 = arith.maximumf %14, %15 : vector<32x128xf32>
    %c0_12 = arith.constant 0 : index
    %c0_13 = arith.constant 0 : index
    %17 = vector.load %arg6[%c0_12, %c0_13] : memref<1x32xbf16, #tpu.memory_space<vmem>>, vector<1x32xbf16>
    %18 = arith.truncf %16 : vector<32x128xf32> to vector<32x128xbf16>
    %cst_14 = arith.constant dense<0.000000e+00> : vector<1x128xf32>
    %19 = tpu.matmul %17, %18, %cst_14 {dimension_numbers = #tpu.dot_dimension_numbers<[1], [0], [0], [1], [0, 0, 1, 1], [], []>} : vector<1x32xbf16>, vector<32x128xbf16>, vector<1x128xf32> -> vector<1x128xf32>
    %c0_15 = arith.constant 0 : index
    %c0_16 = arith.constant 0 : index
    %20 = vector.load %arg7[%c0_15, %c0_16] : memref<1x1xf32, #tpu.memory_space<vmem>>, vector<1x1xf32>
    %21 = vector.broadcast %20 : vector<1x1xf32> to vector<1x128xf32>
    %22 = arith.addf %19, %21 : vector<1x128xf32>
    %23 = arith.negf %22 : vector<1x128xf32>
    %24 = math.exp %23 : vector<1x128xf32>
    %cst_17 = arith.constant 1.000000e+00 : f32
    %25 = vector.broadcast %cst_17 : f32 to vector<1x128xf32>
    %26 = arith.addf %25, %24 : vector<1x128xf32>
    %27 = arith.divf %25, %26 : vector<1x128xf32>
    %c0_18 = arith.constant 0 : index
    %c0_19 = arith.constant 0 : index
    %28 = vector.load %arg8[%c0_18, %c0_19] : memref<1x128xf32, #tpu.memory_space<vmem>>, vector<1x128xf32>
    tpu.vector_store %arg8[%c0_18, %c0_19], %27 {strides = array<i32>} : memref<1x128xf32, #tpu.memory_space<vmem>>, vector<1x128xf32>,
    return
  }
  func.func @transform_0(%arg0: i32) -> (i32, i32) {
    %c0_i32 = arith.constant 0 : i32
    %c0_i32_0 = arith.constant 0 : i32
    return %arg0, %c0_i32 : i32, i32
  }
  func.func @transform_1(%arg0: i32) -> (i32, i32) {
    %c0_i32 = arith.constant 0 : i32
    %c0_i32_0 = arith.constant 0 : i32
    %c0_i32_1 = arith.constant 0 : i32
    return %c0_i32, %c0_i32_0 : i32, i32
  }
  func.func @transform_2(%arg0: i32) -> (i32, i32) {
    %c0_i32 = arith.constant 0 : i32
    %c0_i32_0 = arith.constant 0 : i32
    %c0_i32_1 = arith.constant 0 : i32
    return %c0_i32, %c0_i32_0 : i32, i32
  }
  func.func @transform_3(%arg0: i32) -> (i32, i32) {
    %c0_i32 = arith.constant 0 : i32
    %c0_i32_0 = arith.constant 0 : i32
    %c0_i32_1 = arith.constant 0 : i32
    return %c0_i32, %c0_i32_0 : i32, i32
  }
  func.func @transform_4(%arg0: i32) -> (i32, i32) {
    %c0_i32 = arith.constant 0 : i32
    %c0_i32_0 = arith.constant 0 : i32
    %c0_i32_1 = arith.constant 0 : i32
    return %c0_i32, %c0_i32_0 : i32, i32
  }
  func.func @transform_5(%arg0: i32) -> (i32, i32) {
    %c0_i32 = arith.constant 0 : i32
    %c0_i32_0 = arith.constant 0 : i32
    %c0_i32_1 = arith.constant 0 : i32
    return %c0_i32, %c0_i32_0 : i32, i32
  }
  func.func @transform_6(%arg0: i32) -> (i32, i32) {
    %c0_i32 = arith.constant 0 : i32
    %c0_i32_0 = arith.constant 0 : i32
    %c0_i32_1 = arith.constant 0 : i32
    return %c0_i32, %c0_i32_0 : i32, i32
  }
  func.func @transform_7(%arg0: i32) -> (i32, i32) {
    %c0_i32 = arith.constant 0 : i32
    %c0_i32_0 = arith.constant 0 : i32
    return %c0_i32, %arg0 : i32, i32
  }
}

</mosaic_0001>

<llo_original>
// kernel: forecasting_nn_forward.1
$region0: #{forecasting_nn_forward.1}
  #allocation0 [shape = 'u32[]', space=smem, size = 0x4, offset = 0x4, fixed_abs, tag = 'smem constant byte address 0x4 - core index']
  #allocation1 [shape = 'u32[144,128]{1,0:T(1,128)}', space=vmem, size = 0x12000, scoped, tag = 'internal scratch']
  #allocation2 [shape = 'f32[1,1]{1,0:T(1,128)S(1)}', space=vmem, size = 0x200, scoped, tag = 'scoped memory for forecasting_nn_forward.1']
  %s0 = inlined_call_operand.vmem [shape: f32[256,12], index: 0, kind: input, shape index: {}]
  %s1 = inlined_call_operand.vmem [shape: bf16[64,12], index: 1, kind: input, shape index: {}]
  %s2 = inlined_call_operand.vmem [shape: f32[64,1], index: 2, kind: input, shape index: {}]
  %s3 = inlined_call_operand.vmem [shape: bf16[32,64], index: 3, kind: input, shape index: {}]
  %s4 = inlined_call_operand.vmem [shape: f32[32,1], index: 4, kind: input, shape index: {}]
  %s5 = inlined_call_operand.vmem [shape: bf16[1,32], index: 5, kind: input, shape index: {}]
  %s6 = inlined_call_operand.<no memory space> [shape: f32[1,1], index: 6, kind: input, shape index: {}]
  %s7 = inlined_call_operand.hbm [shape: f32[1,256], index: 7, kind: output, shape index: {}]
  %s8 = sld [smem:[#allocation0]]
  $region61: #{forecasting_nn_forward.1} parent=0
    _
  %s10 = ssub.s32 1, %s8
  %s11 = scalar_select 0, %s10, %s8
  %v12 = vstv %s6
  %13 = vst [vmem:[#allocation2] sm:$0x1] %v12
  $region1: #{forecasting_nn_forward.1} parent=0
    #allocation3 [shape = 'u8[1024]{0}', space=vmem, size = 0x400, scoped, tag = 'output window, operand 0']
    #allocation4 [shape = 's32[2]{0}', space=sflag, size = 0x8, scoped, tag = 'scoped memory for forecasting_nn_forward.1']
    %14 = vsyncpa [#allocation4], 0
    %s15 = scalar_lea.sflag [#allocation4], 1
    %16 = vsyncpa %s15, 0
    loop: start=0, step=1, limit=4
    $region2: #{forecasting_nn_forward.1} parent=1 // loop_pre_header
      _
    $region3: #{forecasting_nn_forward.1} parent=1 // loop_header
      %s18 = sphi 0, %s22
      %p19 = scmp.ge.s32.totalorder %s18, 4
      %s28 = sphi 0, %s30
      %s31 = sphi 0, %s28
      %s32 = sphi 0, %s31
      %s48 = sphi 0, %s32
      %s52 = sphi 0, %s52
      %s54 = sphi 0, %s52
      %s55 = sphi 0, %s54
      %s69 = sphi 0, %s55
      %s73 = sphi 0, %s73
      %s75 = sphi 0, %s73
      %s76 = sphi 0, %s75
      %s90 = sphi 0, %s76
      %s94 = sphi 0, %s94
      %s96 = sphi 0, %s94
      %s97 = sphi 0, %s96
      %s111 = sphi 0, %s97
      %s115 = sphi 0, %s115
      %s117 = sphi 0, %s115
      %s118 = sphi 0, %s117
      %s132 = sphi 0, %s118
      %s136 = sphi 0, %s136
      %s138 = sphi 0, %s136
      %s139 = sphi 0, %s138
      %s153 = sphi 0, %s139
      %s157 = sphi 0, %s157
      %s159 = sphi 0, %s157
      %s160 = sphi 0, %s159
      %s174 = sphi 0, %s160
      %s180 = sphi 0, %s182
      %s183 = sphi 0, %s180
      %s184 = sphi 0, %s183
      %s200 = sphi 0, %s184
    $region4: #{forecasting_nn_forward.1} parent=1 // loop_header_branch
      %21 = sbr.rel (%p19) target = $region8
    $region5: #{forecasting_nn_forward.1} parent=1 // loop_body
      %s23 = ssub.s32 %s18, 1
      %s24 = ssub.s32 %s18, 2
      %s25 = sadd.s32 %s18, 1
      %s26 = ssub.s32 %s18, %s25
      %p27 = scmp.eq.s32.totalorder %s26, 0
      %s29 = sadd.s32 %s28, 1
      %s30 = scalar_select %p27, %s28, %s29
      %p33 = pneg %p27
      %p34 = scmp.eq.s32.totalorder %s18, 1
      %p35 = por %p33, %p34
      %p36 = scmp.ne.s32.totalorder %s28, %s31
      %p37 = scmp.eq.s32.totalorder %s18, 0
      %p38 = por %p36, %p37
      %p39 = scmp.ne.s32.totalorder %s28, %s31
      %p40 = scmp.eq.s32.totalorder %s23, 1
      %p41 = por %p39, %p40
      %p42 = scmp.ne.s32.totalorder %s31, %s32
      %p43 = scmp.eq.s32.totalorder %s23, 0
      %p44 = por %p42, %p43
      %p45 = scmp.ne.s32.totalorder %s31, %s32
      %p46 = scmp.eq.s32.totalorder %s24, 1
      %p47 = por %p45, %p46
      %p49 = scmp.ne.s32.totalorder %s32, %s48
      %p50 = scmp.eq.s32.totalorder %s24, 0
      %p51 = por %p49, %p50
      %s53 = sadd.s32 %s52, 1
      %p56 = scmp.eq.s32.totalorder %s18, 1
      %p57 = scmp.ne.s32.totalorder %s52, %s54
      %p58 = scmp.eq.s32.totalorder %s18, 0
      %p59 = por %p57, %p58
      %p60 = scmp.ne.s32.totalorder %s52, %s54
      %p61 = scmp.eq.s32.totalorder %s23, 1
      %p62 = por %p60, %p61
      %p63 = scmp.ne.s32.totalorder %s54, %s55
      %p64 = scmp.eq.s32.totalorder %s23, 0
      %p65 = por %p63, %p64
      %p66 = scmp.ne.s32.totalorder %s54, %s55
      %p67 = scmp.eq.s32.totalorder %s24, 1
      %p68 = por %p66, %p67
      %p70 = scmp.ne.s32.totalorder %s55, %s69
      %p71 = scmp.eq.s32.totalorder %s24, 0
      %p72 = por %p70, %p71
      %s74 = sadd.s32 %s73, 1
      %p77 = scmp.eq.s32.totalorder %s18, 1
      %p78 = scmp.ne.s32.totalorder %s73, %s75
      %p79 = scmp.eq.s32.totalorder %s18, 0
      %p80 = por %p78, %p79
      %p81 = scmp.ne.s32.totalorder %s73, %s75
      %p82 = scmp.eq.s32.totalorder %s23, 1
      %p83 = por %p81, %p82
      %p84 = scmp.ne.s32.totalorder %s75, %s76
      %p85 = scmp.eq.s32.totalorder %s23, 0
      %p86 = por %p84, %p85
      %p87 = scmp.ne.s32.totalorder %s75, %s76
      %p88 = scmp.eq.s32.totalorder %s24, 1
      %p89 = por %p87, %p88
      %p91 = scmp.ne.s32.totalorder %s76, %s90
      %p92 = scmp.eq.s32.totalorder %s24, 0
      %p93 = por %p91, %p92
      %s95 = sadd.s32 %s94, 1
      %p98 = scmp.eq.s32.totalorder %s18, 1
      %p99 = scmp.ne.s32.totalorder %s94, %s96
      %p100 = scmp.eq.s32.totalorder %s18, 0
      %p101 = por %p99, %p100
      %p102 = scmp.ne.s32.totalorder %s94, %s96
      %p103 = scmp.eq.s32.totalorder %s23, 1
      %p104 = por %p102, %p103
      %p105 = scmp.ne.s32.totalorder %s96, %s97
      %p106 = scmp.eq.s32.totalorder %s23, 0
      %p107 = por %p105, %p106
      %p108 = scmp.ne.s32.totalorder %s96, %s97
      %p109 = scmp.eq.s32.totalorder %s24, 1
      %p110 = por %p108, %p109
      %p112 = scmp.ne.s32.totalorder %s97, %s111
      %p113 = scmp.eq.s32.totalorder %s24, 0
      %p114 = por %p112, %p113
      %s116 = sadd.s32 %s115, 1
      %p119 = scmp.eq.s32.totalorder %s18, 1
      %p120 = scmp.ne.s32.totalorder %s115, %s117
      %p121 = scmp.eq.s32.totalorder %s18, 0
      %p122 = por %p120, %p121
      %p123 = scmp.ne.s32.totalorder %s115, %s117
      %p124 = scmp.eq.s32.totalorder %s23, 1
      %p125 = por %p123, %p124
      %p126 = scmp.ne.s32.totalorder %s117, %s118
      %p127 = scmp.eq.s32.totalorder %s23, 0
      %p128 = por %p126, %p127
      %p129 = scmp.ne.s32.totalorder %s117, %s118
      %p130 = scmp.eq.s32.totalorder %s24, 1
      %p131 = por %p129, %p130
      %p133 = scmp.ne.s32.totalorder %s118, %s132
      %p134 = scmp.eq.s32.totalorder %s24, 0
      %p135 = por %p133, %p134
      %s137 = sadd.s32 %s136, 1
      %p140 = scmp.eq.s32.totalorder %s18, 1
      %p141 = scmp.ne.s32.totalorder %s136, %s138
      %p142 = scmp.eq.s32.totalorder %s18, 0
      %p143 = por %p141, %p142
      %p144 = scmp.ne.s32.totalorder %s136, %s138
      %p145 = scmp.eq.s32.totalorder %s23, 1
      %p146 = por %p144, %p145
      %p147 = scmp.ne.s32.totalorder %s138, %s139
      %p148 = scmp.eq.s32.totalorder %s23, 0
      %p149 = por %p147, %p148
      %p150 = scmp.ne.s32.totalorder %s138, %s139
      %p151 = scmp.eq.s32.totalorder %s24, 1
      %p152 = por %p150, %p151
      %p154 = scmp.ne.s32.totalorder %s139, %s153
      %p155 = scmp.eq.s32.totalorder %s24, 0
      %p156 = por %p154, %p155
      %s158 = sadd.s32 %s157, 1
      %p161 = scmp.eq.s32.totalorder %s18, 1
      %p162 = scmp.ne.s32.totalorder %s157, %s159
      %p163 = scmp.eq.s32.totalorder %s18, 0
      %p164 = por %p162, %p163
      %p165 = scmp.ne.s32.totalorder %s157, %s159
      %p166 = scmp.eq.s32.totalorder %s23, 1
      %p167 = por %p165, %p166
      %p168 = scmp.ne.s32.totalorder %s159, %s160
      %p169 = scmp.eq.s32.totalorder %s23, 0
      %p170 = por %p168, %p169
      %p171 = scmp.ne.s32.totalorder %s159, %s160
      %p172 = scmp.eq.s32.totalorder %s24, 1
      %p173 = por %p171, %p172
      %p175 = scmp.ne.s32.totalorder %s160, %s174
      %p176 = scmp.eq.s32.totalorder %s24, 0
      %p177 = por %p175, %p176
      %s178 = ssub.s32 %s18, %s25
      %p179 = scmp.eq.s32.totalorder %s178, 0
      %s181 = sadd.s32 %s180, 1
      %s182 = scalar_select %p179, %s180, %s181
      %p185 = pneg %p179
      %p186 = scmp.eq.s32.totalorder %s18, 1
      %p187 = por %p185, %p186
      %p188 = scmp.ne.s32.totalorder %s180, %s183
      %p189 = scmp.eq.s32.totalorder %s18, 0
      %p190 = por %p188, %p189
      %p191 = scmp.ne.s32.totalorder %s180, %s183
      %p192 = scmp.eq.s32.totalorder %s23, 1
      %p193 = por %p191, %p192
      %p194 = scmp.ne.s32.totalorder %s183, %s184
      %p195 = scmp.eq.s32.totalorder %s23, 0
      %p196 = por %p194, %p195
      %p197 = scmp.ne.s32.totalorder %s183, %s184
      %p198 = scmp.eq.s32.totalorder %s24, 1
      %p199 = por %p197, %p198
      %p201 = scmp.ne.s32.totalorder %s184, %s200
      %p202 = scmp.eq.s32.totalorder %s24, 0
      %p203 = por %p201, %p202
      %p204 = scmp.le.s32.totalorder 1, %s18
      %p205 = scmp.lt.s32.totalorder %s18, 3
      %p206 = pnand %p204, %p205
      %p207 = pneg %p206
      // Predicated region
      $region9: #{forecasting_nn_forward.1} parent=5 // pred_check
        _
      $region10: #{forecasting_nn_forward.1} parent=5 // pred_check_branch
        %209 = sbr.rel (%p206) target = $region12
      $region11: #{forecasting_nn_forward.1} parent=5 // pred_region
        %s210 = ssub.s32 %s18, 1
        // Predicated region
        $region13: #{forecasting_nn_forward.1} parent=11 // pred_check
          %p211 = pneg %p65
        $region14: #{forecasting_nn_forward.1} parent=11 // pred_check_branch
          %213 = sbr.rel (%p211) target = $region16
        $region15: #{forecasting_nn_forward.1} parent=11 // pred_region
          _
        $region16: #{forecasting_nn_forward.1} parent=11 // pred_fallthru
          _
        // Predicated region
        $region17: #{forecasting_nn_forward.1} parent=11 // pred_check
          %p214 = pneg %p86
        $region18: #{forecasting_nn_forward.1} parent=11 // pred_check_branch
          %216 = sbr.rel (%p214) target = $region20
        $region19: #{forecasting_nn_forward.1} parent=11 // pred_region
          _
        $region20: #{forecasting_nn_forward.1} parent=11 // pred_fallthru
          _
        // Predicated region
        $region21: #{forecasting_nn_forward.1} parent=11 // pred_check
          %p217 = pneg %p107
        $region22: #{forecasting_nn_forward.1} parent=11 // pred_check_branch
          %219 = sbr.rel (%p217) target = $region24
        $region23: #{forecasting_nn_forward.1} parent=11 // pred_region
          _
        $region24: #{forecasting_nn_forward.1} parent=11 // pred_fallthru
          _
        // Predicated region
        $region25: #{forecasting_nn_forward.1} parent=11 // pred_check
          %p220 = pneg %p128
        $region26: #{forecasting_nn_forward.1} parent=11 // pred_check_branch
          %222 = sbr.rel (%p220) target = $region28
        $region27: #{forecasting_nn_forward.1} parent=11 // pred_region
          _
        $region28: #{forecasting_nn_forward.1} parent=11 // pred_fallthru
          _
        // Predicated region
        $region29: #{forecasting_nn_forward.1} parent=11 // pred_check
          %p223 = pneg %p149
        $region30: #{forecasting_nn_forward.1} parent=11 // pred_check_branch
          %225 = sbr.rel (%p223) target = $region32
        $region31: #{forecasting_nn_forward.1} parent=11 // pred_region
          _
        $region32: #{forecasting_nn_forward.1} parent=11 // pred_fallthru
          _
        // Predicated region
        $region33: #{forecasting_nn_forward.1} parent=11 // pred_check
          %p226 = pneg %p170
        $region34: #{forecasting_nn_forward.1} parent=11 // pred_check_branch
          %228 = sbr.rel (%p226) target = $region36
        $region35: #{forecasting_nn_forward.1} parent=11 // pred_region
          _
        $region36: #{forecasting_nn_forward.1} parent=11 // pred_fallthru
          _
      $region12: #{forecasting_nn_forward.1} parent=5 // pred_fallthru
        _
      %p229 = scmp.lt.s32.totalorder %s18, 2
      // Predicated region
      $region37: #{forecasting_nn_forward.1} parent=5 // pred_check
        %p230 = pneg %p229
      $region38: #{forecasting_nn_forward.1} parent=5 // pred_check_branch
        %232 = sbr.rel (%p230) target = $region40
      $region39: #{forecasting_nn_forward.1} parent=5 // pred_region
        // Predicated region
        $region41: #{forecasting_nn_forward.1} parent=39 // pred_check
          %p233 = pneg %p38
        $region42: #{forecasting_nn_forward.1} parent=39 // pred_check_branch
          %235 = sbr.rel (%p233) target = $region44
        $region43: #{forecasting_nn_forward.1} parent=39 // pred_region
          %s236 = smul.u32 16, %s18
          %p237 = scmp.lt.s32.totalorder %s236, 31
          %s238 = scalar_select %p237, %s236, 31
          %s239 = smul.addr %s238, 8
          %s240 = scalar_lea.vmem %s0, %s239
          %s241 = smul.u32 16, %s18
        $region44: #{forecasting_nn_forward.1} parent=39 // pred_fallthru
          _
      $region40: #{forecasting_nn_forward.1} parent=5 // pred_fallthru
        _
      %p242 = scmp.le.s32.totalorder 1, %s18
      %p243 = scmp.lt.s32.totalorder %s18, 3
      %p244 = pnand %p242, %p243
      %p245 = pneg %p244
      // Predicated region
      $region45: #{forecasting_nn_forward.1} parent=5 // pred_check
        _
      $region46: #{forecasting_nn_forward.1} parent=5 // pred_check_branch
        %247 = sbr.rel (%p244) target = $region48
      $region47: #{forecasting_nn_forward.1} parent=5 // pred_region
        %s248 = ssub.s32 %s18, 1
        %s249 = smul.u32 16, %s23
        %p250 = scmp.lt.s32.totalorder %s249, 31
        %s251 = scalar_select %p250, %s249, 31
        %s252 = smul.addr %s251, 8
        %s253 = scalar_lea.vmem %s0, %s252
        %p254 = pneg %p44
        %p255 = pneg %p41
        %p256 = pneg %p65
        %p257 = pneg %p62
        %p258 = pneg %p86
        %p259 = pneg %p83
        %p260 = pneg %p107
        %p261 = pneg %p104
        %p262 = pneg %p128
        %p263 = pneg %p125
        %p264 = pneg %p149
        %p265 = pneg %p146
        %p266 = pneg %p170
        %p267 = pneg %p167
        %p268 = pneg %p196
        %p269 = pneg %p193
        %s270 = sand.u32 %s183, 1
        %s271 = scalar_lea.sflag [#allocation4], %s270
        %s272 = sand.u32 %s183, 1
        %s273 = scalar_lea.vmem [#allocation3], %s272
        %s274 = smul.u32 16, %s23
        %p275 = scmp.lt.s32.totalorder %s274, 31
        %s276 = scalar_select %p275, %s274, 31
        %s277 = smul.addr %s276, 8
        %s278 = scalar_lea.vmem %s0, %s277
        %s279 = smul.u32 16, %s23
        %v281 = vld [vmem:[%s278] sm:$0xff]
        %v282 = vld [vmem:[%s278 + $0x8] sm:$0xff]
        %v283 = vld [vmem:[%s278 + $0x10] sm:$0xff]
        %v284 = vld [vmem:[%s278 + $0x18] sm:$0xff]
        %v285 = vld [vmem:[%s278 + $0x20] sm:$0xff]
        %v286 = vld [vmem:[%s278 + $0x28] sm:$0xff]
        %v287 = vld [vmem:[%s278 + $0x30] sm:$0xff]
        %v288 = vld [vmem:[%s278 + $0x38] sm:$0xff]
        %v289 = vld [vmem:[%s278 + $0x40] sm:$0xff]
        %v290 = vld [vmem:[%s278 + $0x48] sm:$0xff]
        %v291 = vld [vmem:[%s278 + $0x50] sm:$0xff]
        %v292 = vld [vmem:[%s278 + $0x58] sm:$0xff]
        %v293 = vld [vmem:[%s278 + $0x60] sm:$0xff]
        %v294 = vld [vmem:[%s278 + $0x68] sm:$0xff]
        %v295 = vld [vmem:[%s278 + $0x70] sm:$0xff]
        %v296 = vld [vmem:[%s278 + $0x78] sm:$0xff]
        %v297 = vpack.c.bf16 %v282, %v281
        %v298 = vpack.c.bf16 %v284, %v283
        %v299 = vpack.c.bf16 %v286, %v285
        %v300 = vpack.c.bf16 %v288, %v287
        %v301 = vpack.c.bf16 %v290, %v289
        %v302 = vpack.c.bf16 %v292, %v291
        %v303 = vpack.c.bf16 %v294, %v293
        %v304 = vpack.c.bf16 %v296, %v295
        %v305 = vld [vmem:[%s1] sm:$0xf]
        %v306 = vld [vmem:[%s1 + $0x4] sm:$0xf]
        %v307 = vld [vmem:[%s1 + $0x8] sm:$0xf]
        %v308 = vld [vmem:[%s1 + $0xc] sm:$0xf]
        %v309 = vld [vmem:[%s1 + $0x10] sm:$0xf]
        %v310 = vld [vmem:[%s1 + $0x14] sm:$0xf]
        %v311 = vld [vmem:[%s1 + $0x18] sm:$0xf]
        %v312 = vld [vmem:[%s1 + $0x1c] sm:$0xf]
        %v313 = vld [vmem:[%s2] sm:$0xff]
        %v314 = vld [vmem:[%s2 + $0x8] sm:$0xff]
        %v315 = vld [vmem:[%s2 + $0x10] sm:$0xff]
        %v316 = vld [vmem:[%s2 + $0x18] sm:$0xff]
        %v317 = vld [vmem:[%s2 + $0x20] sm:$0xff]
        %v318 = vld [vmem:[%s2 + $0x28] sm:$0xff]
        %v319 = vld [vmem:[%s2 + $0x30] sm:$0xff]
        %v320 = vld [vmem:[%s2 + $0x38] sm:$0xff]
        %322 = vset.pattern.permute.xlu0 0
        %323 = vperm.xlu0 %322, %v313
        %v324 = vpop.permute.xlu0 %323
        %327 = vset.pattern.permute.xlu0 0
        %328 = vperm.xlu0 %327, %v314
        %v329 = vpop.permute.xlu0 %328
        %332 = vset.pattern.permute.xlu0 0
        %333 = vperm.xlu0 %332, %v315
        %v334 = vpop.permute.xlu0 %333
        %337 = vset.pattern.permute.xlu0 0
        %338 = vperm.xlu0 %337, %v316
        %v339 = vpop.permute.xlu0 %338
        %342 = vset.pattern.permute.xlu0 0
        %343 = vperm.xlu0 %342, %v317
        %v344 = vpop.permute.xlu0 %343
        %347 = vset.pattern.permute.xlu0 0
        %348 = vperm.xlu0 %347, %v318
        %v349 = vpop.permute.xlu0 %348
        %352 = vset.pattern.permute.xlu0 0
        %353 = vperm.xlu0 %352, %v319
        %v354 = vpop.permute.xlu0 %353
        %357 = vset.pattern.permute.xlu0 0
        %358 = vperm.xlu0 %357, %v320
        %v359 = vpop.permute.xlu0 %358
        %v369 = vunpack.c.l.b16 %v305
        %v370 = vunpack.c.l.b16 %v306
        %v371 = vunpack.c.l.b16 %v307
        %v372 = vunpack.c.l.b16 %v308
        %v373 = vunpack.c.l.b16 %v309
        %v374 = vunpack.c.l.b16 %v310
        %v375 = vunpack.c.l.b16 %v311
        %v376 = vunpack.c.l.b16 %v312
        %v377 = vpack.c.b16 %v370, %v369
        %v378 = vpack.c.b16 %v372, %v371
        %v379 = vpack.c.b16 %v374, %v373
        %v380 = vpack.c.b16 %v376, %v375
        %vm381 = vcmask 97280
        %v383 = vsel %vm381, %v377, 0
        %v386 = vsel %vm381, %v378, 0
        %v389 = vsel %vm381, %v379, 0
        %v392 = vsel %vm381, %v380, 0
        %v395 = vsel %vm381, %v297, 0
        %v398 = vsel %vm381, %v298, 0
        %v401 = vsel %vm381, %v299, 0
        %v404 = vsel %vm381, %v300, 0
        %v407 = vsel %vm381, %v301, 0
        %v410 = vsel %vm381, %v302, 0
        %v413 = vsel %vm381, %v303, 0
        %v416 = vsel %vm381, %v304, 0
        %418 = vmatprep.subr.bf16.mxu0 0
        %419 = vmatpush1.bf16.xpose.msra.mxu0 %v395
        %420 = vmatprep.subr.bf16.mxu0 0
        %421 = vmatpush1.bf16.xpose.msra.mxu0 %v398
        %422 = vmatprep.subr.bf16.mxu0 0
        %423 = vmatpush1.bf16.xpose.msra.mxu0 %v401
        %424 = vmatprep.subr.bf16.mxu0 0
        %425 = vmatpush1.bf16.xpose.msra.mxu0 %v404
        %426 = vmatprep.subr.bf16.mxu0 0
        %427 = vmatpush1.bf16.xpose.msra.mxu0 %v407
        %428 = vmatprep.subr.bf16.mxu0 0
        %429 = vmatpush1.bf16.xpose.msra.mxu0 %v410
        %430 = vmatprep.subr.bf16.mxu0 0
        %431 = vmatpush1.bf16.xpose.msra.mxu0 %v413
        %432 = vmatprep.subr.bf16.mxu0 0
        %433 = vmatpush1.bf16.xpose.msra.mxu0 %v416
        %434 = vmatprep.subr.bf16.mxu0 0
        %435 = vmatpush1.bf16.xpose.msra.mxu0 0
        %436 = vmatprep.subr.bf16.mxu0 0
        %437 = vmatpush1.bf16.xpose.msra.mxu0 0
        %438 = vmatprep.subr.bf16.mxu0 0
        %439 = vmatpush1.bf16.xpose.msra.mxu0 0
        %440 = vmatprep.subr.bf16.mxu0 0
        %441 = vmatpush1.bf16.xpose.msra.mxu0 0
        %442 = vmatprep.subr.bf16.mxu0 0
        %443 = vmatpush1.bf16.xpose.msra.mxu0 0
        %444 = vmatprep.subr.bf16.mxu0 0
        %445 = vmatpush1.bf16.xpose.msra.mxu0 0
        %446 = vmatprep.subr.bf16.mxu0 0
        %447 = vmatpush1.bf16.xpose.msra.mxu0 0
        %448 = vmatprep.subr.bf16.mxu0 0
        %449 = vmatpush1.bf16.xpose.msra.mxu0 0
        %450 = vmatprep.mubr.bf16.mxu0 0
        %451 = vmatmul.mubr.bf16.gmra.mrb[0].mxu0 %v383
        %v452 = vpop.f32.mrb[0].mxu0
        %v453 = vadd.f32 %v324, %v452
        %v454 = vpop.f32.mrb[0].mxu0
        %v455 = vpop.f32.mrb[0].mxu0
        %v456 = vadd.f32 %v329, %v455
        %v457 = vpop.f32.mrb[0].mxu0
        %458 = vmatprep.mubr.bf16.mxu0 0
        %459 = vmatmul.mubr.bf16.gmra.mrb[0].mxu0 %v386
        %v460 = vpop.f32.mrb[0].mxu0
        %v461 = vadd.f32 %v334, %v460
        %v462 = vpop.f32.mrb[0].mxu0
        %v463 = vpop.f32.mrb[0].mxu0
        %v464 = vadd.f32 %v339, %v463
        %v465 = vpop.f32.mrb[0].mxu0
        %466 = vmatprep.mubr.bf16.mxu0 0
        %467 = vmatmul.mubr.bf16.gmra.mrb[0].mxu0 %v389
        %v468 = vpop.f32.mrb[0].mxu0
        %v469 = vadd.f32 %v344, %v468
        %v470 = vpop.f32.mrb[0].mxu0
        %v471 = vpop.f32.mrb[0].mxu0
        %v472 = vadd.f32 %v349, %v471
        %v473 = vpop.f32.mrb[0].mxu0
        %474 = vmatprep.mubr.bf16.mxu0 0
        %475 = vmatmul.mubr.bf16.gmra.mrb[0].mxu0 %v392
        %v476 = vpop.f32.mrb[0].mxu0
        %v477 = vadd.f32 %v354, %v476
        %v478 = vpop.f32.mrb[0].mxu0
        %v479 = vpop.f32.mrb[0].mxu0
        %v480 = vadd.f32 %v359, %v479
        %v481 = vpop.f32.mrb[0].mxu0
        %482 = vdwg.mxu0
        %v483 = vmax.f32 %v453, 0.0
        %v484 = vmax.f32 %v456, 0.0
        %v485 = vmax.f32 %v461, 0.0
        %v486 = vmax.f32 %v464, 0.0
        %v487 = vmax.f32 %v469, 0.0
        %v488 = vmax.f32 %v472, 0.0
        %v489 = vmax.f32 %v477, 0.0
        %v490 = vmax.f32 %v480, 0.0
        %v491 = vld [vmem:[%s3] sm:$0xf]
        %v492 = vld [vmem:[%s3 + $0x4] sm:$0xf]
        %v493 = vld [vmem:[%s3 + $0x8] sm:$0xf]
        %v494 = vld [vmem:[%s3 + $0xc] sm:$0xf]
        %v495 = vpack.c.bf16 %v484, %v483
        %v496 = vpack.c.bf16 %v486, %v485
        %v497 = vpack.c.bf16 %v488, %v487
        %v498 = vpack.c.bf16 %v490, %v489
        %v499 = vld [vmem:[%s4] sm:$0xff]
        %v500 = vld [vmem:[%s4 + $0x8] sm:$0xff]
        %v501 = vld [vmem:[%s4 + $0x10] sm:$0xff]
        %v502 = vld [vmem:[%s4 + $0x18] sm:$0xff]
        %504 = vset.pattern.permute.xlu0 0
        %505 = vperm.xlu0 %504, %v499
        %v506 = vpop.permute.xlu0 %505
        %509 = vset.pattern.permute.xlu0 0
        %510 = vperm.xlu0 %509, %v500
        %v511 = vpop.permute.xlu0 %510
        %514 = vset.pattern.permute.xlu0 0
        %515 = vperm.xlu0 %514, %v501
        %v516 = vpop.permute.xlu0 %515
        %519 = vset.pattern.permute.xlu0 0
        %520 = vperm.xlu0 %519, %v502
        %v521 = vpop.permute.xlu0 %520
        %v527 = vunpack.c.l.b16 %v491
        %v528 = vunpack.c.l.b16 %v492
        %v529 = vunpack.c.l.b16 %v493
        %v530 = vunpack.c.l.b16 %v494
        %v531 = vpack.c.b16 %v528, %v527
        %v532 = vpack.c.b16 %v530, %v529
        %vm533 = vcmask 523264
        %v535 = vsel %vm533, %v531, 0
        %v538 = vsel %vm533, %v532, 0
        %540 = vmatprep.subr.bf16.mxu0 0
        %541 = vmatpush1.bf16.msra.mxu0 %v495
        %542 = vmatprep.subr.bf16.mxu0 0
        %543 = vmatpush1.bf16.msra.mxu0 %v496
        %544 = vmatprep.subr.bf16.mxu0 0
        %545 = vmatpush1.bf16.msra.mxu0 %v497
        %546 = vmatprep.subr.bf16.mxu0 0
        %547 = vmatpush1.bf16.msra.mxu0 %v498
        %548 = vmatprep.subr.bf16.mxu0 0
        %549 = vmatpush1.bf16.msra.mxu0 0
        %550 = vmatprep.subr.bf16.mxu0 0
        %551 = vmatpush1.bf16.msra.mxu0 0
        %552 = vmatprep.subr.bf16.mxu0 0
        %553 = vmatpush1.bf16.msra.mxu0 0
        %554 = vmatprep.subr.bf16.mxu0 0
        %555 = vmatpush1.bf16.msra.mxu0 0
        %556 = vmatprep.subr.bf16.mxu0 0
        %557 = vmatpush1.bf16.msra.mxu0 0
        %558 = vmatprep.subr.bf16.mxu0 0
        %559 = vmatpush1.bf16.msra.mxu0 0
        %560 = vmatprep.subr.bf16.mxu0 0
        %561 = vmatpush1.bf16.msra.mxu0 0
        %562 = vmatprep.subr.bf16.mxu0 0
        %563 = vmatpush1.bf16.msra.mxu0 0
        %564 = vmatprep.subr.bf16.mxu0 0
        %565 = vmatpush1.bf16.msra.mxu0 0
        %566 = vmatprep.subr.bf16.mxu0 0
        %567 = vmatpush1.bf16.msra.mxu0 0
        %568 = vmatprep.subr.bf16.mxu0 0
        %569 = vmatpush1.bf16.msra.mxu0 0
        %570 = vmatprep.subr.bf16.mxu0 0
        %571 = vmatpush1.bf16.msra.mxu0 0
        %572 = vmatprep.mubr.bf16.mxu0 0
        %573 = vmatmul.mubr.bf16.gmra.mrb[0].mxu0 %v535
        %v574 = vpop.f32.mrb[0].mxu0
        %v575 = vadd.f32 %v506, %v574
        %v576 = vpop.f32.mrb[0].mxu0
        %v577 = vpop.f32.mrb[0].mxu0
        %v578 = vadd.f32 %v511, %v577
        %v579 = vpop.f32.mrb[0].mxu0
        %580 = vmatprep.mubr.bf16.mxu0 0
        %581 = vmatmul.mubr.bf16.gmra.mrb[0].mxu0 %v538
        %v582 = vpop.f32.mrb[0].mxu0
        %v583 = vadd.f32 %v516, %v582
        %v584 = vpop.f32.mrb[0].mxu0
        %v585 = vpop.f32.mrb[0].mxu0
        %v586 = vadd.f32 %v521, %v585
        %v587 = vpop.f32.mrb[0].mxu0
        %588 = vdwg.mxu0
        %v589 = vmax.f32 %v575, 0.0
        %v590 = vmax.f32 %v578, 0.0
        %v591 = vmax.f32 %v583, 0.0
        %v592 = vmax.f32 %v586, 0.0
        %v593 = vld [vmem:[%s5] sm:$0x1]
        %v594 = vpack.c.bf16 %v590, %v589
        %v595 = vpack.c.bf16 %v592, %v591
        %v596 = vld [vmem:[#allocation2] sm:$0x1]
        %598 = vset.pattern.permute.xlu0 0
        %599 = vperm.xlu0 %598, %v596
        %v600 = vpop.permute.xlu0 %599
        %v602 = vlaneseq
        %v603 = vshrl.u32 %v602, 7
        %v604 = vsub.s32 0, %v603
        %v605 = vrot.slane %v600, %v604
        %vm606 = vcmask 261120
        %v608 = vsel %vm606, %v593, 0
        %610 = vmatprep.subr.bf16.mxu0 0
        %611 = vmatpush1.bf16.msra.mxu0 %v594
        %612 = vmatprep.subr.bf16.mxu0 0
        %613 = vmatpush1.bf16.msra.mxu0 %v595
        %614 = vmatprep.subr.bf16.mxu0 0
        %615 = vmatpush1.bf16.msra.mxu0 0
        %616 = vmatprep.subr.bf16.mxu0 0
        %617 = vmatpush1.bf16.msra.mxu0 0
        %618 = vmatprep.subr.bf16.mxu0 0
        %619 = vmatpush1.bf16.msra.mxu0 0
        %620 = vmatprep.subr.bf16.mxu0 0
        %621 = vmatpush1.bf16.msra.mxu0 0
        %622 = vmatprep.subr.bf16.mxu0 0
        %623 = vmatpush1.bf16.msra.mxu0 0
        %624 = vmatprep.subr.bf16.mxu0 0
        %625 = vmatpush1.bf16.msra.mxu0 0
        %626 = vmatprep.subr.bf16.mxu0 0
        %627 = vmatpush1.bf16.msra.mxu0 0
        %628 = vmatprep.subr.bf16.mxu0 0
        %629 = vmatpush1.bf16.msra.mxu0 0
        %630 = vmatprep.subr.bf16.mxu0 0
        %631 = vmatpush1.bf16.msra.mxu0 0
        %632 = vmatprep.subr.bf16.mxu0 0
        %633 = vmatpush1.bf16.msra.mxu0 0
        %634 = vmatprep.subr.bf16.mxu0 0
        %635 = vmatpush1.bf16.msra.mxu0 0
        %636 = vmatprep.subr.bf16.mxu0 0
        %637 = vmatpush1.bf16.msra.mxu0 0
        %638 = vmatprep.subr.bf16.mxu0 0
        %639 = vmatpush1.bf16.msra.mxu0 0
        %640 = vmatprep.subr.bf16.mxu0 0
        %641 = vmatpush1.bf16.msra.mxu0 0
        %642 = vmatprep.mubr.bf16.mxu0 0
        %643 = vmatmul.mubr.bf16.gmra.mrb[0].mxu0 %v608
        %v644 = vpop.f32.mrb[0].mxu0
        %v645 = vadd.f32 %v605, %v644
        %v646 = vpop.f32.mrb[0].mxu0
        %v647 = vpop.f32.mrb[0].mxu0
        %v648 = vpop.f32.mrb[0].mxu0
        %649 = vdwg.mxu0
        %v650 = vxor.u32 %v645, 2147483648
        %v651 = vmul.f32 %v650, 1.442695
        %v652 = vpow.pop %v651
        %v653 = vadd.f32 %v652, 1.0
        %v654 = vrcp.pop %v653
        %v655 = vmul.f32 1.0, %v654
        %656 = vst [vmem:[%s273] sm:$0x1] %v655
        %s657 = sand.u32 %s183, 1
        %s658 = scalar_lea.sflag [#allocation4], %s657
        %s659 = sand.u32 %s183, 1
        %s660 = scalar_lea.vmem [#allocation3], %s659
        // Predicated region
        $region49: #{forecasting_nn_forward.1} parent=47 // pred_check
          %p661 = pneg %p193
        $region50: #{forecasting_nn_forward.1} parent=47 // pred_check_branch
          %663 = sbr.rel (%p661) target = $region52
        $region51: #{forecasting_nn_forward.1} parent=47 // pred_region
          %s665 = ssub.s32 16, 16
          %666 = vsyncadd %s658, %s665
          %s667 = smul.addr %s23, 16
          %s668 = scalar_lea.hbm %s7, %s667
          %s670 = sshll.u32 %s660, 4
          %s671 = int_to_ptr.vmem [resolvable:$true] %s670
          %673 = dma.vmem_to_hbm [thread:$0]  %s671, 16, %s668, %s658
        $region52: #{forecasting_nn_forward.1} parent=47 // pred_fallthru
          _
      $region48: #{forecasting_nn_forward.1} parent=5 // pred_fallthru
        _
      %p674 = scmp.le.s32.totalorder 2, %s18
      // Predicated region
      $region53: #{forecasting_nn_forward.1} parent=5 // pred_check
        %p675 = pneg %p674
      $region54: #{forecasting_nn_forward.1} parent=5 // pred_check_branch
        %677 = sbr.rel (%p675) target = $region56
      $region55: #{forecasting_nn_forward.1} parent=5 // pred_region
        %s678 = ssub.s32 %s18, 2
        // Predicated region
        $region57: #{forecasting_nn_forward.1} parent=55 // pred_check
          %p679 = pneg %p199
        $region58: #{forecasting_nn_forward.1} parent=55 // pred_check_branch
          %681 = sbr.rel (%p679) target = $region60
        $region59: #{forecasting_nn_forward.1} parent=55 // pred_region
          %s682 = sand.u32 %s184, 1
          %s683 = scalar_lea.sflag [#allocation4], %s682
          %s684 = sand.u32 %s184, 1
          %s685 = scalar_lea.vmem [#allocation3], %s684
          %686 = dma.done %s683, 16
        $region60: #{forecasting_nn_forward.1} parent=55 // pred_fallthru
          _
      $region56: #{forecasting_nn_forward.1} parent=5 // pred_fallthru
        _
    $region6: #{forecasting_nn_forward.1} parent=1 // loop_footer
      %s22 = sadd.s32 1, %s18
    $region7: #{forecasting_nn_forward.1} parent=1 // loop_footer_branch
      %17 = sbr.rel target = $region3
    $region8: #{forecasting_nn_forward.1} parent=1 // loop_exit
      _
    %687 = vsyncpa [#allocation4], 1
    %s688 = scalar_lea.sflag [#allocation4], 1
    %689 = vsyncpa %s688, 1

</llo_original>
